<compile_context>
chip_gen: v7x
topology: tpu7x:2x2x1
jax: 0.10.0
libtpu: 0.0.40
codegen_flags: <defaults>
</compile_context>

<pallas_src>
import functools
import math

import jax
import jax.numpy as jnp
from jax.experimental import pallas as pl
from jax.experimental.pallas import tpu as pltpu


def _channel_kernel(*refs, use_fold, inv_len):
    """out = power_normalize(x) + noise_eff for one (Bt, Lg, G) batch slab.

    refs = (x_ref, fold_ref, n_ref, o_ref)  when use_fold
         = (x_ref, n_ref, o_ref)            otherwise

    x_ref    : VMEM (Bt, Lg, G)  signal block; G = g*D lanes (g L-rows folded)
    fold_ref : VMEM (G, G)       fold matrix, F[i, j] = 1 iff i == j (mod D)
    n_ref    : VMEM (Bt, Lg, G)  pre-scaled (and, for fading, pre-mixed) noise
    o_ref    : VMEM (Bt, Lg, G)  output block
    """
    if use_fold:
        x_ref, fold_ref, n_ref, o_ref = refs
    else:
        x_ref, n_ref, o_ref = refs

    x = x_ref[...]

    # Sum of squares over the sublane (folded-L) axis -> (Bt, G).
    ssq = jnp.sum(x * x, axis=1)
    if use_fold:
        # ssq @ F puts, at every lane j, the sum over all lanes congruent to j
        # modulo D, i.e. the full sum over the original L rows for feature
        # d = j % D, already replicated across the g lane groups.
        ssq = jnp.dot(ssq, fold_ref[...], preferred_element_type=jnp.float32)

    # mean over dim=1 of the original (B, L, D) layout; rsqrt*mul, not sqrt+div.
    inv_p = jax.lax.rsqrt(ssq * jnp.float32(inv_len)) * jnp.float32(
        1.0 / math.sqrt(2.0))

    o_ref[...] = x * inv_p[:, None, :] + n_ref[...]


def _snr_to_noise_std(snr):
    snr_lin = 10.0 ** (jnp.asarray(snr, jnp.float32) / 10.0)
    return (1.0 / jnp.sqrt(2.0 * snr_lin)).astype(jnp.float32)


def _sample_channel(key, channel_type, k_factor):
    """Draw (H_real, H_imag) with the same statistics as the torch module; also
    return the key reserved for the additive noise."""
    k_h1, k_h2, k_noise = jax.random.split(key, 3)
    if channel_type == "AWGN":
        hr = jnp.float32(1.0)
        hi = jnp.float32(0.0)
    elif channel_type == "Rayleigh":
        s = math.sqrt(0.5)
        hr = jnp.float32(s) * jax.random.normal(k_h1, (), jnp.float32)
        hi = jnp.float32(s) * jax.random.normal(k_h2, (), jnp.float32)
    elif channel_type == "Rician":
        K = 10.0 ** (k_factor / 10.0)
        mean = math.sqrt(K / (K + 1.0))
        std = math.sqrt(1.0 / (K + 1.0)) * math.sqrt(0.5)
        hr = jnp.float32(mean) + jnp.float32(std) * jax.random.normal(
            k_h1, (), jnp.float32)
        hi = jnp.float32(std) * jax.random.normal(k_h2, (), jnp.float32)
    else:
        raise ValueError("Unsupported channel type. Choose from "
                         "'AWGN', 'Rayleigh', 'Rician'.")
    return hr, hi, k_noise


def _pick_batch_tile(B, row_bytes, target_bytes=6 << 20):
    """Largest batch tile whose block stays under ~target_bytes.

    No forced '>= 2 grid steps' split (it only helps the 2-TensorCore v7x and
    shrinks tiles on single-TC v5e/v6e); non-divisor B is padded by the caller.
    """
    return int(max(1, min(B, target_bytes // max(row_bytes, 1))))


def channel_forward(x, snr, *, channel_type="AWGN", k_factor=5.0,
                    key=jax.random.PRNGKey(0)):
    """JAX/Pallas equivalent of ChannelModel(channel_type, k_factor)(x, snr)."""
    x = jnp.asarray(x, jnp.float32)
    B, L, D = x.shape
    apply_fading = channel_type in ("Rayleigh", "Rician")
    if channel_type not in ("AWGN", "Rayleigh", "Rician"):
        raise ValueError("Unsupported channel type. Choose from "
                         "'AWGN', 'Rayleigh', 'Rician'.")
    if apply_fading:
        assert D % 2 == 0, "feature dim must be even (complex pairs)"

    noise_std = _snr_to_noise_std(snr)
    hr, hi, k_noise = _sample_channel(key, channel_type, k_factor)

    # TODO(synk): noise drawn with jax.random.normal (statistically N(0, std)
    # but not bit-matched to torch.normal); on-chip pltpu.prng_* is avoided
    # because it has no CPU/interpret lowering.
    noise = noise_std * jax.random.normal(k_noise, (B, L, D), jnp.float32)

    if apply_fading:
        # (x_norm @ H) @ inv(H) == x_norm up to ~1e-7 rounding, so only the
        # additive noise needs the channel applied: out = x_norm + noise@inv(H).
        det = hr * hr + hi * hi
        h_inv = jnp.stack([jnp.stack([hr, hi]), jnp.stack([-hi, hr])]) / det
        noise = (noise.reshape(B, -1, 2) @ h_inv).reshape(B, L, D)

    # --- lane-dense folding: (B, L, D) -> (B, L//g, g*D), metadata-only. -----
    g = 128 // math.gcd(D, 128)          # smallest g with (g*D) % 128 == 0
    if g > 1 and L % g == 0:
        use_fold = True
        Lg, G = L // g, g * D
    else:
        # TODO(synk): when D % 128 != 0 and L % g != 0 the stores stay partially
        # masked; an L-padding scheme could recover lane density.
        use_fold = False
        g, Lg, G = 1, L, D

    x_f = x.reshape(B, Lg, G)
    n_f = noise.reshape(B, Lg, G)

    fold = None
    if use_fold:
        idx = jnp.arange(G, dtype=jnp.int32)
        fold = (idx[:, None] % D == idx[None, :] % D).astype(jnp.float32)

    # --- batch tiling; pad awkward B instead of collapsing to tiny tiles. ----
    row_bytes = Lg * G * 4
    Bt = _pick_batch_tile(B, row_bytes)
    Bp = pl.cdiv(B, Bt) * Bt
    if Bp != B:
        # Padded rows: signal=1 (finite normalize), noise=0; sliced off below.
        x_f = jnp.concatenate(
            [x_f, jnp.ones((Bp - B, Lg, G), jnp.float32)], axis=0)
        n_f = jnp.concatenate(
            [n_f, jnp.zeros((Bp - B, Lg, G), jnp.float32)], axis=0)
    grid = (Bp // Bt,)

    blk = lambda b: (b, 0, 0)
    data_spec = pl.BlockSpec((Bt, Lg, G), blk)

    in_specs = [data_spec]
    operands = [x_f]
    if use_fold:
        in_specs.append(pl.BlockSpec((G, G), lambda b: (0, 0)))  # resident
        operands.append(fold)
    in_specs.append(data_spec)
    operands.append(n_f)

    n_elem = Bp * Lg * G
    cost = pl.CostEstimate(
        flops=int(5 * n_elem + (2 * Bp * G * G if use_fold else 0)),
        transcendentals=int(Bp * G),
        bytes_accessed=int(3 * n_elem * 4 + (G * G * 4 if use_fold else 0)),
    )

    kernel = functools.partial(_channel_kernel, use_fold=use_fold,
                               inv_len=1.0 / float(L))

    out = pl.pallas_call(
        kernel,
        out_shape=jax.ShapeDtypeStruct((Bp, Lg, G), jnp.float32),
        grid_spec=pltpu.PrefetchScalarGridSpec(
            num_scalar_prefetch=0,
            grid=grid,
            in_specs=in_specs,
            out_specs=data_spec,
        ),
        compiler_params=pltpu.CompilerParams(
            dimension_semantics=("parallel",),
            vmem_limit_bytes=48 * 1024 * 1024,   # safe under v7x's 64 MiB VMEM
        ),
        cost_estimate=cost,
    )(*operands)

    out = out[:B]
    if apply_fading:
        # Fading paths return the rebound (B, N, 2) shape, as in PyTorch.
        return out.reshape(B, (L * D) // 2, 2)
    return out.reshape(B, L, D)


def _reference(x, snr, channel_type, k_factor, key):
    """Pure-JAX mirror of the PyTorch forward (same draws as channel_forward)."""
    x = jnp.asarray(x, jnp.float32)
    B, L, D = x.shape
    noise_std = _snr_to_noise_std(snr)
    hr, hi, k_noise = _sample_channel(key, channel_type, k_factor)
    noise = noise_std * jax.random.normal(k_noise, (B, L, D), jnp.float32)
    x_norm = x / (math.sqrt(2.0) * jnp.sqrt(jnp.mean(x * x, axis=1, keepdims=True)))
    if channel_type == "AWGN":
        return x_norm + noise
    H = jnp.stack([jnp.stack([hr, -hi]), jnp.stack([hi, hr])])
    det = hr * hr + hi * hi
    H_inv = jnp.stack([jnp.stack([hr, hi]), jnp.stack([-hi, hr])]) / det
    tx = x_norm.reshape(B, -1, 2) @ H
    rx = tx + noise.reshape(B, -1, 2)
    return rx @ H_inv


if __name__ == "__main__":
    key = jax.random.PRNGKey(0)
    kx, kc = jax.random.split(key)

    B, L, D = 2, 8, 32  # small shapes consistent with the module's forward
    x = jax.random.normal(kx, (B, L, D), jnp.float32)
    snr = 10.0

    out_awgn = channel_forward(x, snr, channel_type="AWGN", key=kc)
    out_ray = channel_forward(x, snr, channel_type="Rayleigh", key=kc)
    out_ric = channel_forward(x, snr, channel_type="Rician", k_factor=5.0, key=kc)
    jax.block_until_ready((out_awgn, out_ray, out_ric))

    assert out_awgn.shape == (B, L, D)
    assert out_ray.shape == (B, L * D // 2, 2)
    assert out_ric.shape == (B, L * D // 2, 2)
    assert bool(jnp.all(jnp.isfinite(out_awgn)))
    assert bool(jnp.all(jnp.isfinite(out_ray)))
    assert bool(jnp.all(jnp.isfinite(out_ric)))

    # Numerical check against a pure-JAX reference using the identical draws.
    ref_awgn = _reference(x, snr, "AWGN", 5.0, kc)
    ref_ray = _reference(x, snr, "Rayleigh", 5.0, kc)
    ref_ric = _reference(x, snr, "Rician", 5.0, kc)
    assert bool(jnp.allclose(out_awgn, ref_awgn, atol=1e-4, rtol=1e-4))
    assert bool(jnp.allclose(out_ray, ref_ray, atol=1e-4, rtol=1e-4))
    assert bool(jnp.allclose(out_ric, ref_ric, atol=1e-4, rtol=1e-4))

    print("KERNEL_OK")
</pallas_src>

<mosaic_0001>
module attributes {stable_mosaic.version = 11 : i64} {
  func.func @_channel_kernel(%arg0: i32, %arg1: memref<2x2x128xf32, #tpu.memory_space<vmem>>, %arg2: memref<128x128xf32, #tpu.memory_space<vmem>>, %arg3: memref<2x2x128xf32, #tpu.memory_space<vmem>>, %arg4: memref<2x2x128xf32, #tpu.memory_space<vmem>>) attributes {dimension_semantics = [#tpu.dimension_semantics<parallel>], iteration_bounds = array<i64: 1>, scalar_prefetch = 0 : i64, scratch_operands = 0 : i64, tpu.core_type = #tpu.core_type<tc>, window_params = [{transform_indices = @transform_0, window_bounds = array<i64: 2, 2, 128>}, {pipeline_mode = #tpu.pipeline_mode<synchronous>, transform_indices = @transform_1, window_bounds = array<i64: 128, 128>}, {transform_indices = @transform_2, window_bounds = array<i64: 2, 2, 128>}, {transform_indices = @transform_3, window_bounds = array<i64: 2, 2, 128>}]} {
    %c0 = arith.constant 0 : index
    %c0_0 = arith.constant 0 : index
    %c0_1 = arith.constant 0 : index
    %0 = vector.load %arg1[%c0, %c0_0, %c0_1] : memref<2x2x128xf32, #tpu.memory_space<vmem>>, vector<2x2x128xf32>
    %1 = arith.mulf %0, %0 : vector<2x2x128xf32>
    %cst = arith.constant dense<0.000000e+00> : vector<2x128xf32>
    %2 = vector.multi_reduction <add>, %1, %cst [1] : vector<2x2x128xf32> to vector<2x128xf32>
    %c0_2 = arith.constant 0 : index
    %c0_3 = arith.constant 0 : index
    %3 = vector.load %arg2[%c0_2, %c0_3] : memref<128x128xf32, #tpu.memory_space<vmem>>, vector<128x128xf32>
    %cst_4 = arith.constant dense<0.000000e+00> : vector<2x128xf32>
    %4 = tpu.matmul %2, %3, %cst_4 {dimension_numbers = #tpu.dot_dimension_numbers<[1], [0], [0], [1], [0, 0, 1, 1], [], []>} : vector<2x128xf32>, vector<128x128xf32>, vector<2x128xf32> -> vector<2x128xf32>
    %cst_5 = arith.constant 1.250000e-01 : f32
    %5 = vector.broadcast %cst_5 : f32 to vector<2x128xf32>
    %6 = arith.mulf %4, %5 : vector<2x128xf32>
    %7 = math.rsqrt %6 : vector<2x128xf32>
    %cst_6 = arith.constant 0.707106769 : f32
    %8 = vector.broadcast %cst_6 : f32 to vector<2x128xf32>
    %9 = arith.mulf %7, %8 : vector<2x128xf32>
    %10 = vector.shape_cast %9 : vector<2x128xf32> to vector<2x1x128xf32>
    %11 = vector.broadcast %10 : vector<2x1x128xf32> to vector<2x2x128xf32>
    %12 = arith.mulf %0, %11 : vector<2x2x128xf32>
    %c0_7 = arith.constant 0 : index
    %c0_8 = arith.constant 0 : index
    %c0_9 = arith.constant 0 : index
    %13 = vector.load %arg3[%c0_7, %c0_8, %c0_9] : memref<2x2x128xf32, #tpu.memory_space<vmem>>, vector<2x2x128xf32>
    %14 = arith.addf %12, %13 : vector<2x2x128xf32>
    %c0_10 = arith.constant 0 : index
    %c0_11 = arith.constant 0 : index
    %c0_12 = arith.constant 0 : index
    %15 = vector.load %arg4[%c0_10, %c0_11, %c0_12] : memref<2x2x128xf32, #tpu.memory_space<vmem>>, vector<2x2x128xf32>
    tpu.vector_store %arg4[%c0_10, %c0_11, %c0_12], %14 {strides = array<i32>} : memref<2x2x128xf32, #tpu.memory_space<vmem>>, vector<2x2x128xf32>,
    return
  }
  func.func @transform_0(%arg0: i32) -> (i32, i32, i32) {
    %c0_i32 = arith.constant 0 : i32
    %c0_i32_0 = arith.constant 0 : i32
    %c0_i32_1 = arith.constant 0 : i32
    return %arg0, %c0_i32, %c0_i32_0 : i32, i32, i32
  }
  func.func @transform_1(%arg0: i32) -> (i32, i32) {
    %c0_i32 = arith.constant 0 : i32
    %c0_i32_0 = arith.constant 0 : i32
    %c0_i32_1 = arith.constant 0 : i32
    return %c0_i32, %c0_i32_0 : i32, i32
  }
  func.func @transform_2(%arg0: i32) -> (i32, i32, i32) {
    %c0_i32 = arith.constant 0 : i32
    %c0_i32_0 = arith.constant 0 : i32
    %c0_i32_1 = arith.constant 0 : i32
    return %arg0, %c0_i32, %c0_i32_0 : i32, i32, i32
  }
  func.func @transform_3(%arg0: i32) -> (i32, i32, i32) {
    %c0_i32 = arith.constant 0 : i32
    %c0_i32_0 = arith.constant 0 : i32
    %c0_i32_1 = arith.constant 0 : i32
    return %arg0, %c0_i32, %c0_i32_0 : i32, i32, i32
  }
}

</mosaic_0001>

<llo_original>
// kernel: tpu_custom_call.1
$region0: #{tpu_custom_call.1}
  #allocation0 [shape = 'u32[]', space=smem, size = 0x4, offset = 0x4, fixed_abs, tag = 'smem constant byte address 0x4 - core index']
  #allocation1 [shape = 'u32[144,128]{1,0:T(1,128)}', space=vmem, size = 0x12000, scoped, tag = 'internal scratch']
  %s0 = inlined_call_operand.hbm [shape: f32[2,2,128], index: 0, kind: input, shape index: {}]
  %s1 = inlined_call_operand.hbm [shape: f32[128,128], index: 1, kind: input, shape index: {}]
  %s2 = inlined_call_operand.vmem [shape: f32[2,2,128], index: 2, kind: input, shape index: {}]
  %s3 = inlined_call_operand.hbm [shape: f32[2,2,128], index: 3, kind: output, shape index: {}]
  %s4 = sld [smem:[#allocation0]]
  $region30: #{tpu_custom_call.1} parent=0
    _
  %s6 = ssub.s32 1, %s4
  %s7 = scalar_select 0, %s6, %s4
  $region1: #{tpu_custom_call.1} parent=0
    #allocation2 [shape = 'u8[2048]{0}', space=vmem, size = 0x800, scoped, tag = 'input window, operand 0, single buffered']
    #allocation3 [shape = 's32[1]{0}', space=sflag, size = 0x4, scoped, tag = 'scoped memory for tpu_custom_call.1']
    #allocation4 [shape = 's32[1]{0}', space=sflag, size = 0x4, scoped, tag = 'scoped memory for tpu_custom_call.1']
    #allocation5 [shape = 'u8[65536]{0}', space=vmem, size = 0x10000, scoped, tag = 'input window, operand 1, single buffered']
    #allocation6 [shape = 's32[1]{0}', space=sflag, size = 0x4, scoped, tag = 'scoped memory for tpu_custom_call.1']
    #allocation7 [shape = 'u8[2048]{0}', space=vmem, size = 0x800, scoped, tag = 'output window, operand 0, single buffered']
    %8 = vsyncpa [#allocation3], 0
    %9 = vsyncpa [#allocation6], 0
    %10 = vsyncpa [#allocation4], 0
    // Predicated region
    $region2: #{tpu_custom_call.1} parent=1 // pred_check
      _
    $region3: #{tpu_custom_call.1} parent=1 // pred_check_branch
      %12 = sbr.rel (0) target = $region5
    $region4: #{tpu_custom_call.1} parent=1 // pred_region
      %s14 = ssub.s32 64, 64
      %15 = vsyncadd [#allocation3], %s14
      %s16 = sshll.u32 [#allocation2], 4
      %s17 = int_to_ptr.vmem [resolvable:$true] %s16
      %22 = dma.hbm_to_vmem [thread:$0]  %s0, 64, %s17, [#allocation3], 32, 32, 2
    $region5: #{tpu_custom_call.1} parent=1 // pred_fallthru
      _
    // Predicated region
    $region6: #{tpu_custom_call.1} parent=1 // pred_check
      _
    $region7: #{tpu_custom_call.1} parent=1 // pred_check_branch
      %24 = sbr.rel (0) target = $region9
    $region8: #{tpu_custom_call.1} parent=1 // pred_region
      %s26 = ssub.s32 2048, 2048
      %27 = vsyncadd [#allocation6], %s26
      %s28 = sshll.u32 [#allocation5], 4
      %s29 = int_to_ptr.vmem [resolvable:$true] %s28
      %34 = dma.hbm_to_vmem [thread:$0]  %s1, 2048, %s29, [#allocation6], 128, 128, 8
    $region9: #{tpu_custom_call.1} parent=1 // pred_fallthru
      _
    // Predicated region
    $region10: #{tpu_custom_call.1} parent=1 // pred_check
      _
    $region11: #{tpu_custom_call.1} parent=1 // pred_check_branch
      %36 = sbr.rel (0) target = $region13
    $region12: #{tpu_custom_call.1} parent=1 // pred_region
      _
    $region13: #{tpu_custom_call.1} parent=1 // pred_fallthru
      _
    // Predicated region
    $region14: #{tpu_custom_call.1} parent=1 // pred_check
      _
    $region15: #{tpu_custom_call.1} parent=1 // pred_check_branch
      %38 = sbr.rel (0) target = $region17
    $region16: #{tpu_custom_call.1} parent=1 // pred_region
      %39 = dma.done [#allocation3], 64
    $region17: #{tpu_custom_call.1} parent=1 // pred_fallthru
      _
    // Predicated region
    $region18: #{tpu_custom_call.1} parent=1 // pred_check
      _
    $region19: #{tpu_custom_call.1} parent=1 // pred_check_branch
      %41 = sbr.rel (0) target = $region21
    $region20: #{tpu_custom_call.1} parent=1 // pred_region
      %42 = dma.done [#allocation6], 2048
    $region21: #{tpu_custom_call.1} parent=1 // pred_fallthru
      _
    %v43 = vld [vmem:[#allocation2] sm:$0x3]
    %v44 = vld [vmem:[#allocation2 + $0x2] sm:$0x3]
    %v45 = vmul.f32 %v43, %v43
    %v46 = vmul.f32 %v44, %v44
    %vm47 = vcmask 1041408
    %v48 = vsel %vm47, %v45, 0.0
    %v49 = vrot.slane %v48, 4
    %v50 = vadd.f32 %v48, %v49
    %v51 = vrot.slane %v50, 2
    %v52 = vadd.f32 %v50, %v51
    %v53 = vrot.slane %v52, 1
    %v54 = vadd.f32 %v52, %v53
    %v55 = vsel %vm47, %v46, 0.0
    %v56 = vrot.slane %v55, 4
    %v57 = vadd.f32 %v55, %v56
    %v58 = vrot.slane %v57, 2
    %v59 = vadd.f32 %v57, %v58
    %v60 = vrot.slane %v59, 1
    %v61 = vadd.f32 %v59, %v60
    %v62 = vld [vmem:[#allocation5] sm:$0xff]
    %v63 = vld [vmem:[#allocation5 + $0x8] sm:$0xff]
    %v64 = vld [vmem:[#allocation5 + $0x10] sm:$0xff]
    %v65 = vld [vmem:[#allocation5 + $0x18] sm:$0xff]
    %v66 = vld [vmem:[#allocation5 + $0x20] sm:$0xff]
    %v67 = vld [vmem:[#allocation5 + $0x28] sm:$0xff]
    %v68 = vld [vmem:[#allocation5 + $0x30] sm:$0xff]
    %v69 = vld [vmem:[#allocation5 + $0x38] sm:$0xff]
    %v70 = vld [vmem:[#allocation5 + $0x40] sm:$0xff]
    %v71 = vld [vmem:[#allocation5 + $0x48] sm:$0xff]
    %v72 = vld [vmem:[#allocation5 + $0x50] sm:$0xff]
    %v73 = vld [vmem:[#allocation5 + $0x58] sm:$0xff]
    %v74 = vld [vmem:[#allocation5 + $0x60] sm:$0xff]
    %v75 = vld [vmem:[#allocation5 + $0x68] sm:$0xff]
    %v76 = vld [vmem:[#allocation5 + $0x70] sm:$0xff]
    %v77 = vld [vmem:[#allocation5 + $0x78] sm:$0xff]
    %vm80 = vcmask 1041409
    %v81 = vsel %vm80, %v61, %v54
    %83 = vmatprep.subr.mxu0 0.0
    %84 = vmatpush1.msra.mxu0 %v62
    %85 = vmatprep.subr.mxu0 0.0
    %86 = vmatpush1.msra.mxu0 %v63
    %87 = vmatprep.subr.mxu0 0.0
    %88 = vmatpush1.msra.mxu0 %v64
    %89 = vmatprep.subr.mxu0 0.0
    %90 = vmatpush1.msra.mxu0 %v65
    %91 = vmatprep.subr.mxu0 0.0
    %92 = vmatpush1.msra.mxu0 %v66
    %93 = vmatprep.subr.mxu0 0.0
    %94 = vmatpush1.msra.mxu0 %v67
    %95 = vmatprep.subr.mxu0 0.0
    %96 = vmatpush1.msra.mxu0 %v68
    %97 = vmatprep.subr.mxu0 0.0
    %98 = vmatpush1.msra.mxu0 %v69
    %99 = vmatprep.subr.mxu0 0.0
    %100 = vmatpush1.msra.mxu0 %v70
    %101 = vmatprep.subr.mxu0 0.0
    %102 = vmatpush1.msra.mxu0 %v71
    %103 = vmatprep.subr.mxu0 0.0
    %104 = vmatpush1.msra.mxu0 %v72
    %105 = vmatprep.subr.mxu0 0.0
    %106 = vmatpush1.msra.mxu0 %v73
    %107 = vmatprep.subr.mxu0 0.0
    %108 = vmatpush1.msra.mxu0 %v74
    %109 = vmatprep.subr.mxu0 0.0
    %110 = vmatpush1.msra.mxu0 %v75
    %111 = vmatprep.subr.mxu0 0.0
    %112 = vmatpush1.msra.mxu0 %v76
    %113 = vmatprep.subr.mxu0 0.0
    %114 = vmatpush1.msra.mxu0 %v77
    %115 = vmatprep.subr.mxu0 0.0
    %116 = vmatpush1.msra.mxu0 0.0
    %117 = vmatprep.subr.mxu0 0.0
    %118 = vmatpush1.msra.mxu0 0.0
    %119 = vmatprep.subr.mxu0 0.0
    %120 = vmatpush1.msra.mxu0 0.0
    %121 = vmatprep.subr.mxu0 0.0
    %122 = vmatpush1.msra.mxu0 0.0
    %123 = vmatprep.subr.mxu0 0.0
    %124 = vmatpush1.msra.mxu0 0.0
    %125 = vmatprep.subr.mxu0 0.0
    %126 = vmatpush1.msra.mxu0 0.0
    %127 = vmatprep.subr.mxu0 0.0
    %128 = vmatpush1.msra.mxu0 0.0
    %129 = vmatprep.subr.mxu0 0.0
    %130 = vmatpush1.msra.mxu0 0.0
    %131 = vmatprep.subr.mxu0 0.0
    %132 = vmatpush1.msra.mxu0 0.0
    %133 = vmatprep.subr.mxu0 0.0
    %134 = vmatpush1.msra.mxu0 0.0
    %135 = vmatprep.subr.mxu0 0.0
    %136 = vmatpush1.msra.mxu0 0.0
    %137 = vmatprep.subr.mxu0 0.0
    %138 = vmatpush1.msra.mxu0 0.0
    %139 = vmatprep.subr.mxu0 0.0
    %140 = vmatpush1.msra.mxu0 0.0
    %141 = vmatprep.subr.mxu0 0.0
    %142 = vmatpush1.msra.mxu0 0.0
    %143 = vmatprep.subr.mxu0 0.0
    %144 = vmatpush1.msra.mxu0 0.0
    %145 = vmatprep.subr.mxu0 0.0
    %146 = vmatpush1.msra.mxu0 0.0
    %147 = vmatprep.mubr.f32.mxu0 0.0
    %148 = vmatmul.mubr.f32.gmra.mrb[0].mxu0 %v81
    %v149 = vpop.f32.mrb[0].mxu0
    %v150 = vadd.f32 0.0, %v149
    %v151 = vpop.f32.mrb[0].mxu0
    %152 = vdwg.mxu0
    %v153 = vmul.f32 %v150, 0.125
    %v154 = vrsqrt.pop %v153
    %v155 = vmul.f32 %v154, 0.70710677
    %v158 = vunpack.c.l.s4 1966171168
    %v159 = vunpack.c.0.s8 %v158
    %v160 = vlaneseq
    %v161 = vshrl.u32 %v160, 7
    %v162 = vsub.s32 %v159, %v161
    %v163 = vrot.slane %v155, %v162
    %v164 = vcombine.high %v163, %v163
    %v166 = vunpack.c.l.s4 1966171168
    %v167 = vunpack.c.0.s8 %v166
    %v168 = vlaneseq
    %v169 = vshrl.u32 %v168, 7
    %v170 = vsub.s32 %v167, %v169
    %v171 = vrot.slane %v163, %v170
    %v173 = vunpack.c.l.s4 1966171168
    %v174 = vunpack.c.0.s8 %v173
    %v175 = vlaneseq
    %v176 = vshrl.u32 %v175, 7
    %v177 = vsub.s32 %v174, %v176
    %v178 = vrot.slane %v164, %v177
    %v179 = vlaneseq
    %v180 = vshrl.u32 %v179, 7
    %v181 = vsub.s32 0, %v180
    %v182 = vrot.slane %v171, %v181
    %v183 = vlaneseq
    %v184 = vshrl.u32 %v183, 7
    %v185 = vsub.s32 0, %v184
    %v186 = vrot.slane %v178, %v185
    %v189 = vmul.f32 %v43, %v182
    %v190 = vmul.f32 %v44, %v186
    %v191 = vld [vmem:[%s2] sm:$0x3]
    %v192 = vld [vmem:[%s2 + $0x2] sm:$0x3]
    %v193 = vadd.f32 %v189, %v191
    %v194 = vadd.f32 %v190, %v192
    %195 = vst [vmem:[#allocation7] sm:$0x3] %v193
    %196 = vst [vmem:[#allocation7 + $0x2] sm:$0x3] %v194
    // Predicated region
    $region22: #{tpu_custom_call.1} parent=1 // pred_check
      _
    $region23: #{tpu_custom_call.1} parent=1 // pred_check_branch
      %198 = sbr.rel (0) target = $region25
    $region24: #{tpu_custom_call.1} parent=1 // pred_region
      %s200 = ssub.s32 64, 64
      %201 = vsyncadd [#allocation4], %s200
      %s202 = sshll.u32 [#allocation7], 4
      %s203 = int_to_ptr.vmem [resolvable:$true] %s202
      %208 = dma.vmem_to_hbm [thread:$0]  %s203, 64, %s3, [#allocation4], 32, 32, 2
    $region25: #{tpu_custom_call.1} parent=1 // pred_fallthru
      _
    // Predicated region
    $region26: #{tpu_custom_call.1} parent=1 // pred_check
      _
    $region27: #{tpu_custom_call.1} parent=1 // pred_check_branch
      %210 = sbr.rel (0) target = $region29
    $region28: #{tpu_custom_call.1} parent=1 // pred_region
      %211 = dma.done [#allocation4], 64
    $region29: #{tpu_custom_call.1} parent=1 // pred_fallthru
      _
    %212 = vsyncpa [#allocation3], 1
    %213 = vsyncpa [#allocation6], 1
    %214 = vsyncpa [#allocation4], 1

</llo_original>
